<compile_context>
chip_gen: v6e
topology: v6e:2x2x1
jax: 0.10.0
libtpu: 0.0.40
codegen_flags: <defaults>
</compile_context>

<pallas_src>
import jax
import jax.numpy as jnp
from jax.experimental import pallas as pl
from jax.experimental.pallas import tpu as pltpu

HIDDEN = (256, 128, 64, 32)
BN_EPS = 1e-5


def _round_up(x, m):
    return ((x + m - 1) // m) * m


def _leaky_relu(h, negative_slope=0.1):
    return jnp.where(h >= 0, h, negative_slope * h)


def _kernel(x_ref, w1_ref, w2_ref, w3_ref, w4_ref, w5_ref, b_ref, b5_ref, o_ref):
    # Each layer: bf16 x bf16 MXU matmul with f32 accumulation, then f32
    # bias-add + LeakyReLU on the VPU, then cast back to bf16 for the next MXU.
    # (bf16 elementwise on v6e/v7x is a possible further win; kept f32 so the
    #  same kernel also runs well on v5e, which has no bf16 VPU.)
    d1, d2, d3, d4 = HIDDEN

    h = x_ref[...].astype(jnp.bfloat16)

    h = jnp.dot(h, w1_ref[...], preferred_element_type=jnp.float32)
    h = _leaky_relu(h + b_ref[0:1, :d1]).astype(jnp.bfloat16)

    h = jnp.dot(h, w2_ref[...], preferred_element_type=jnp.float32)
    h = _leaky_relu(h + b_ref[1:2, :d2]).astype(jnp.bfloat16)

    h = jnp.dot(h, w3_ref[...], preferred_element_type=jnp.float32)
    h = _leaky_relu(h + b_ref[2:3, :d3]).astype(jnp.bfloat16)

    h = jnp.dot(h, w4_ref[...], preferred_element_type=jnp.float32)
    h = _leaky_relu(h + b_ref[3:4, :d4]).astype(jnp.bfloat16)

    o_ref[...] = (
        jnp.dot(h, w5_ref[...], preferred_element_type=jnp.float32) + b5_ref[...]
    )


def _fold_bn(params):
    """Fold eval-mode BatchNorm scale/shift into the next layer (exact, f32)."""
    (w1, b1, s1, t1,
     w2, b2, s2, t2,
     w3, b3, s3, t3,
     w4, b4, s4, t4,
     w5, b5) = params
    w2f = s1.reshape(-1, 1) * w2
    b2f = b2 + t1 @ w2
    w3f = s2.reshape(-1, 1) * w3
    b3f = b3 + t2 @ w3
    w4f = s3.reshape(-1, 1) * w4
    b4f = b4 + t3 @ w4
    w5f = s4.reshape(-1, 1) * w5
    b5f = b5 + t4 @ w5
    return (w1, b1), (w2f, b2f), (w3f, b3f), (w4f, b4f), (w5f, b5f)


def prepare_params(params):
    """One-time offline prep (hoisted out of the per-call path):
    BN fold, bf16 weight casts for the MXU, bias packing."""
    (w1, b1), (w2f, b2f), (w3f, b3f), (w4f, b4f), (w5f, b5f) = _fold_bn(params)

    # MXU operands in bf16 (accumulation stays f32 inside the kernel).
    w_ops = tuple(jnp.asarray(w, jnp.bfloat16) for w in (w1, w2f, w3f, w4f, w5f))

    # Pack the 4 hidden-layer bias rows into a single (8, 256) f32 slab.
    bw = HIDDEN[0]

    def _row(b):
        return jnp.pad(b, ((0, 0), (0, bw - b.shape[1])))

    bias_pack = jnp.concatenate(
        [_row(b1), _row(b2f), _row(b3f), _row(b4f),
         jnp.zeros((4, bw), jnp.float32)],
        axis=0,
    )
    # Output bias stays unpadded (full-dim block in the kernel).
    return w_ops + (bias_pack, jnp.asarray(b5f, jnp.float32))


def _choose_tile_b(batch):
    """Batch tile: large enough to amortize ~0.35us per-grid-step overhead,
    while keeping the grid >= 4 steps for big batches (megacore + pipelining)."""
    b8 = _round_up(batch, 8)
    if b8 <= 1024:
        # Small batch: one tile (or two once >= 512 rows, so a second TC on
        # v7x can help); splitting further would just add per-step overhead.
        return _round_up(pl.cdiv(b8, 2), 8) if b8 >= 512 else b8
    steps = max(4, pl.cdiv(b8, 4096))  # tile capped at 4096 rows
    return _round_up(pl.cdiv(b8, steps), 8)


@jax.jit
def deepcownet_forward(x, prepared):
    w1, w2, w3, w4, w5, bias_pack, b5 = prepared
    B, in_dim = x.shape
    out_size = w5.shape[1]

    tile_b = _choose_tile_b(B)
    b_pad = _round_up(B, tile_b)
    x_p = jnp.pad(x, ((0, b_pad - B), (0, 0)))  # stays f32; bf16 cast in-kernel

    out = pl.pallas_call(
        _kernel,
        out_shape=jax.ShapeDtypeStruct((b_pad, out_size), jnp.float32),
        grid_spec=pl.GridSpec(
            grid=(b_pad // tile_b,),
            in_specs=(
                [pl.BlockSpec((tile_b, in_dim), lambda i: (i, 0))]
                + [pl.BlockSpec(w.shape, lambda i: (0, 0))
                   for w in (w1, w2, w3, w4, w5)]
                + [pl.BlockSpec(bias_pack.shape, lambda i: (0, 0)),
                   pl.BlockSpec(b5.shape, lambda i: (0, 0))]
            ),
            out_specs=pl.BlockSpec((tile_b, out_size), lambda i: (i, 0)),
        ),
        compiler_params=pltpu.CompilerParams(
            dimension_semantics=("parallel",),
        ),
    )(x_p, w1, w2, w3, w4, w5, bias_pack, b5)

    return out[:B]


def init_params(key, input_size, output_size, dtype=jnp.float32):
    """Parameter init mirroring the module's shapes (independent keys per tensor).

    Each hidden layer packs: W (in, out), b (1, out), and BatchNorm1d folded to
    per-feature scale/shift: scale = gamma / sqrt(running_var + eps),
    shift = beta - running_mean * scale.
    """
    dims = [input_size] + list(HIDDEN)
    params = []
    keys = jax.random.split(key, 4 * 6 + 2)
    ki = 0
    for li in range(4):
        fan_in, fan_out = dims[li], dims[li + 1]
        bound = fan_in ** -0.5
        w = jax.random.uniform(keys[ki], (fan_in, fan_out), dtype, -bound, bound); ki += 1
        b = jax.random.uniform(keys[ki], (1, fan_out), dtype, -bound, bound); ki += 1
        gamma = 1.0 + 0.1 * jax.random.normal(keys[ki], (1, fan_out), dtype); ki += 1
        beta = 0.1 * jax.random.normal(keys[ki], (1, fan_out), dtype); ki += 1
        running_mean = 0.05 * jax.random.normal(keys[ki], (1, fan_out), dtype); ki += 1
        running_var = jnp.abs(1.0 + 0.1 * jax.random.normal(keys[ki], (1, fan_out), dtype)); ki += 1
        scale = gamma / jnp.sqrt(running_var + BN_EPS)
        shift = beta - running_mean * scale
        params += [w, b, scale, shift]
    fan_in = dims[-1]
    bound = fan_in ** -0.5
    w5 = jax.random.uniform(keys[ki], (fan_in, output_size), dtype, -bound, bound); ki += 1
    b5 = jax.random.uniform(keys[ki], (1, output_size), dtype, -bound, bound); ki += 1
    return tuple(params) + (w5, b5)


def reference_forward_f32(x, params):
    """Original eval-mode semantics (Linear -> LeakyReLU -> BN -> Dropout=id), f32."""
    (w1, b1, s1, t1,
     w2, b2, s2, t2,
     w3, b3, s3, t3,
     w4, b4, s4, t4,
     w5, b5) = params
    h = x
    for (w, b, s, t) in ((w1, b1, s1, t1), (w2, b2, s2, t2),
                         (w3, b3, s3, t3), (w4, b4, s4, t4)):
        h = _leaky_relu(h @ w + b)
        h = h * s + t
    return h @ w5 + b5


def reference_forward_matched(x, params):
    """Pure-JAX reference with the kernel's exact numerics (BN fold + bf16 MXU ops)."""
    layers = _fold_bn(params)

    def mm(a, w):
        return jnp.dot(a.astype(jnp.bfloat16), w.astype(jnp.bfloat16),
                       preferred_element_type=jnp.float32)

    h = x
    for (w, b) in layers[:-1]:
        h = _leaky_relu(mm(h, w) + b)
    w5f, b5f = layers[-1]
    return mm(h, w5f) + b5f


if __name__ == "__main__":
    key = jax.random.PRNGKey(0)
    k_x, k_p = jax.random.split(key)

    batch = 8
    input_size = 16
    output_size = 4

    x = jax.random.normal(k_x, (batch, input_size), jnp.float32)
    params = init_params(k_p, input_size, output_size)

    prepared = prepare_params(params)          # one-time weight prep (BN fold, bf16)
    out = jax.block_until_ready(deepcownet_forward(x, prepared))
    assert out.shape == (batch, output_size)

    # Tight check against a reference that mirrors the kernel's numerics exactly.
    ref_matched = reference_forward_matched(x, params)
    assert jnp.allclose(out, ref_matched, atol=1e-3, rtol=1e-3), "mismatch vs matched reference"

    # Loose check against the full-f32 eval-mode module semantics (bf16 MXU drift).
    ref_f32 = reference_forward_f32(x, params)
    assert jnp.allclose(out, ref_f32, atol=1e-1, rtol=1e-1), "mismatch vs f32 reference"

    print("KERNEL_OK")
</pallas_src>

<mosaic_0001>
module attributes {stable_mosaic.version = 11 : i64} {
  func.func @_kernel(%arg0: i32, %arg1: memref<8x16xf32, #tpu.memory_space<vmem>>, %arg2: memref<16x256xbf16, #tpu.memory_space<vmem>>, %arg3: memref<256x128xbf16, #tpu.memory_space<vmem>>, %arg4: memref<128x64xbf16, #tpu.memory_space<vmem>>, %arg5: memref<64x32xbf16, #tpu.memory_space<vmem>>, %arg6: memref<32x4xbf16, #tpu.memory_space<vmem>>, %arg7: memref<8x256xf32, #tpu.memory_space<vmem>>, %arg8: memref<1x4xf32, #tpu.memory_space<vmem>>, %arg9: memref<8x4xf32, #tpu.memory_space<vmem>>) attributes {dimension_semantics = [#tpu.dimension_semantics<parallel>], iteration_bounds = array<i64: 1>, scalar_prefetch = 0 : i64, scratch_operands = 0 : i64, tpu.core_type = #tpu.core_type<tc>, window_params = [{transform_indices = @transform_0, window_bounds = array<i64: 8, 16>}, {pipeline_mode = #tpu.pipeline_mode<synchronous>, transform_indices = @transform_1, window_bounds = array<i64: 16, 256>}, {pipeline_mode = #tpu.pipeline_mode<synchronous>, transform_indices = @transform_2, window_bounds = array<i64: 256, 128>}, {pipeline_mode = #tpu.pipeline_mode<synchronous>, transform_indices = @transform_3, window_bounds = array<i64: 128, 64>}, {pipeline_mode = #tpu.pipeline_mode<synchronous>, transform_indices = @transform_4, window_bounds = array<i64: 64, 32>}, {pipeline_mode = #tpu.pipeline_mode<synchronous>, transform_indices = @transform_5, window_bounds = array<i64: 32, 4>}, {pipeline_mode = #tpu.pipeline_mode<synchronous>, transform_indices = @transform_6, window_bounds = array<i64: 8, 256>}, {pipeline_mode = #tpu.pipeline_mode<synchronous>, transform_indices = @transform_7, window_bounds = array<i64: 1, 4>}, {transform_indices = @transform_8, window_bounds = array<i64: 8, 4>}]} {
    %c0 = arith.constant 0 : index
    %c0_0 = arith.constant 0 : index
    %0 = vector.load %arg1[%c0, %c0_0] : memref<8x16xf32, #tpu.memory_space<vmem>>, vector<8x16xf32>
    %1 = arith.truncf %0 : vector<8x16xf32> to vector<8x16xbf16>
    %c0_1 = arith.constant 0 : index
    %c0_2 = arith.constant 0 : index
    %2 = vector.load %arg2[%c0_1, %c0_2] : memref<16x256xbf16, #tpu.memory_space<vmem>>, vector<16x256xbf16>
    %cst = arith.constant dense<0.000000e+00> : vector<8x256xf32>
    %3 = tpu.matmul %1, %2, %cst {dimension_numbers = #tpu.dot_dimension_numbers<[1], [0], [0], [1], [0, 0, 1, 1], [], []>} : vector<8x16xbf16>, vector<16x256xbf16>, vector<8x256xf32> -> vector<8x256xf32>
    %c0_3 = arith.constant 0 : index
    %c0_4 = arith.constant 0 : index
    %4 = vector.load %arg7[%c0_3, %c0_4] : memref<8x256xf32, #tpu.memory_space<vmem>>, vector<1x256xf32>
    %5 = vector.broadcast %4 : vector<1x256xf32> to vector<8x256xf32>
    %6 = arith.addf %3, %5 : vector<8x256xf32>
    %cst_5 = arith.constant 0.000000e+00 : f32
    %7 = vector.broadcast %cst_5 : f32 to vector<8x256xf32>
    %8 = arith.cmpf oge, %6, %7 : vector<8x256xf32>
    %cst_6 = arith.constant 1.000000e-01 : f32
    %9 = vector.broadcast %cst_6 : f32 to vector<8x256xf32>
    %10 = arith.mulf %9, %6 : vector<8x256xf32>
    %11 = arith.select %8, %6, %10 : vector<8x256xi1>, vector<8x256xf32>
    %12 = arith.truncf %11 : vector<8x256xf32> to vector<8x256xbf16>
    %c0_7 = arith.constant 0 : index
    %c0_8 = arith.constant 0 : index
    %13 = vector.load %arg3[%c0_7, %c0_8] : memref<256x128xbf16, #tpu.memory_space<vmem>>, vector<256x128xbf16>
    %cst_9 = arith.constant dense<0.000000e+00> : vector<8x128xf32>
    %14 = tpu.matmul %12, %13, %cst_9 {dimension_numbers = #tpu.dot_dimension_numbers<[1], [0], [0], [1], [0, 0, 1, 1], [], []>} : vector<8x256xbf16>, vector<256x128xbf16>, vector<8x128xf32> -> vector<8x128xf32>
    %c1 = arith.constant 1 : index
    %c0_10 = arith.constant 0 : index
    %15 = vector.load %arg7[%c1, %c0_10] : memref<8x256xf32, #tpu.memory_space<vmem>>, vector<1x128xf32>
    %16 = vector.broadcast %15 : vector<1x128xf32> to vector<8x128xf32>
    %17 = arith.addf %14, %16 : vector<8x128xf32>
    %cst_11 = arith.constant 0.000000e+00 : f32
    %18 = vector.broadcast %cst_11 : f32 to vector<8x128xf32>
    %19 = arith.cmpf oge, %17, %18 : vector<8x128xf32>
    %cst_12 = arith.constant 1.000000e-01 : f32
    %20 = vector.broadcast %cst_12 : f32 to vector<8x128xf32>
    %21 = arith.mulf %20, %17 : vector<8x128xf32>
    %22 = arith.select %19, %17, %21 : vector<8x128xi1>, vector<8x128xf32>
    %23 = arith.truncf %22 : vector<8x128xf32> to vector<8x128xbf16>
    %c0_13 = arith.constant 0 : index
    %c0_14 = arith.constant 0 : index
    %24 = vector.load %arg4[%c0_13, %c0_14] : memref<128x64xbf16, #tpu.memory_space<vmem>>, vector<128x64xbf16>
    %cst_15 = arith.constant dense<0.000000e+00> : vector<8x64xf32>
    %25 = tpu.matmul %23, %24, %cst_15 {dimension_numbers = #tpu.dot_dimension_numbers<[1], [0], [0], [1], [0, 0, 1, 1], [], []>} : vector<8x128xbf16>, vector<128x64xbf16>, vector<8x64xf32> -> vector<8x64xf32>
    %c2 = arith.constant 2 : index
    %c0_16 = arith.constant 0 : index
    %26 = vector.load %arg7[%c2, %c0_16] : memref<8x256xf32, #tpu.memory_space<vmem>>, vector<1x64xf32>
    %27 = vector.broadcast %26 : vector<1x64xf32> to vector<8x64xf32>
    %28 = arith.addf %25, %27 : vector<8x64xf32>
    %cst_17 = arith.constant 0.000000e+00 : f32
    %29 = vector.broadcast %cst_17 : f32 to vector<8x64xf32>
    %30 = arith.cmpf oge, %28, %29 : vector<8x64xf32>
    %cst_18 = arith.constant 1.000000e-01 : f32
    %31 = vector.broadcast %cst_18 : f32 to vector<8x64xf32>
    %32 = arith.mulf %31, %28 : vector<8x64xf32>
    %33 = arith.select %30, %28, %32 : vector<8x64xi1>, vector<8x64xf32>
    %34 = arith.truncf %33 : vector<8x64xf32> to vector<8x64xbf16>
    %c0_19 = arith.constant 0 : index
    %c0_20 = arith.constant 0 : index
    %35 = vector.load %arg5[%c0_19, %c0_20] : memref<64x32xbf16, #tpu.memory_space<vmem>>, vector<64x32xbf16>
    %cst_21 = arith.constant dense<0.000000e+00> : vector<8x32xf32>
    %36 = tpu.matmul %34, %35, %cst_21 {dimension_numbers = #tpu.dot_dimension_numbers<[1], [0], [0], [1], [0, 0, 1, 1], [], []>} : vector<8x64xbf16>, vector<64x32xbf16>, vector<8x32xf32> -> vector<8x32xf32>
    %c3 = arith.constant 3 : index
    %c0_22 = arith.constant 0 : index
    %37 = vector.load %arg7[%c3, %c0_22] : memref<8x256xf32, #tpu.memory_space<vmem>>, vector<1x32xf32>
    %38 = vector.broadcast %37 : vector<1x32xf32> to vector<8x32xf32>
    %39 = arith.addf %36, %38 : vector<8x32xf32>
    %cst_23 = arith.constant 0.000000e+00 : f32
    %40 = vector.broadcast %cst_23 : f32 to vector<8x32xf32>
    %41 = arith.cmpf oge, %39, %40 : vector<8x32xf32>
    %cst_24 = arith.constant 1.000000e-01 : f32
    %42 = vector.broadcast %cst_24 : f32 to vector<8x32xf32>
    %43 = arith.mulf %42, %39 : vector<8x32xf32>
    %44 = arith.select %41, %39, %43 : vector<8x32xi1>, vector<8x32xf32>
    %45 = arith.truncf %44 : vector<8x32xf32> to vector<8x32xbf16>
    %c0_25 = arith.constant 0 : index
    %c0_26 = arith.constant 0 : index
    %46 = vector.load %arg6[%c0_25, %c0_26] : memref<32x4xbf16, #tpu.memory_space<vmem>>, vector<32x4xbf16>
    %cst_27 = arith.constant dense<0.000000e+00> : vector<8x4xf32>
    %47 = tpu.matmul %45, %46, %cst_27 {dimension_numbers = #tpu.dot_dimension_numbers<[1], [0], [0], [1], [0, 0, 1, 1], [], []>} : vector<8x32xbf16>, vector<32x4xbf16>, vector<8x4xf32> -> vector<8x4xf32>
    %c0_28 = arith.constant 0 : index
    %c0_29 = arith.constant 0 : index
    %48 = vector.load %arg8[%c0_28, %c0_29] : memref<1x4xf32, #tpu.memory_space<vmem>>, vector<1x4xf32>
    %49 = vector.broadcast %48 : vector<1x4xf32> to vector<8x4xf32>
    %50 = arith.addf %47, %49 : vector<8x4xf32>
    %c0_30 = arith.constant 0 : index
    %c0_31 = arith.constant 0 : index
    %51 = vector.load %arg9[%c0_30, %c0_31] : memref<8x4xf32, #tpu.memory_space<vmem>>, vector<8x4xf32>
    tpu.vector_store %arg9[%c0_30, %c0_31], %50 {strides = array<i32>} : memref<8x4xf32, #tpu.memory_space<vmem>>, vector<8x4xf32>,
    return
  }
  func.func @transform_0(%arg0: i32) -> (i32, i32) {
    %c0_i32 = arith.constant 0 : i32
    %c0_i32_0 = arith.constant 0 : i32
    return %arg0, %c0_i32 : i32, i32
  }
  func.func @transform_1(%arg0: i32) -> (i32, i32) {
    %c0_i32 = arith.constant 0 : i32
    %c0_i32_0 = arith.constant 0 : i32
    %c0_i32_1 = arith.constant 0 : i32
    return %c0_i32, %c0_i32_0 : i32, i32
  }
  func.func @transform_2(%arg0: i32) -> (i32, i32) {
    %c0_i32 = arith.constant 0 : i32
    %c0_i32_0 = arith.constant 0 : i32
    %c0_i32_1 = arith.constant 0 : i32
    return %c0_i32, %c0_i32_0 : i32, i32
  }
  func.func @transform_3(%arg0: i32) -> (i32, i32) {
    %c0_i32 = arith.constant 0 : i32
    %c0_i32_0 = arith.constant 0 : i32
    %c0_i32_1 = arith.constant 0 : i32
    return %c0_i32, %c0_i32_0 : i32, i32
  }
  func.func @transform_4(%arg0: i32) -> (i32, i32) {
    %c0_i32 = arith.constant 0 : i32
    %c0_i32_0 = arith.constant 0 : i32
    %c0_i32_1 = arith.constant 0 : i32
    return %c0_i32, %c0_i32_0 : i32, i32
  }
  func.func @transform_5(%arg0: i32) -> (i32, i32) {
    %c0_i32 = arith.constant 0 : i32
    %c0_i32_0 = arith.constant 0 : i32
    %c0_i32_1 = arith.constant 0 : i32
    return %c0_i32, %c0_i32_0 : i32, i32
  }
  func.func @transform_6(%arg0: i32) -> (i32, i32) {
    %c0_i32 = arith.constant 0 : i32
    %c0_i32_0 = arith.constant 0 : i32
    %c0_i32_1 = arith.constant 0 : i32
    return %c0_i32, %c0_i32_0 : i32, i32
  }
  func.func @transform_7(%arg0: i32) -> (i32, i32) {
    %c0_i32 = arith.constant 0 : i32
    %c0_i32_0 = arith.constant 0 : i32
    %c0_i32_1 = arith.constant 0 : i32
    return %c0_i32, %c0_i32_0 : i32, i32
  }
  func.func @transform_8(%arg0: i32) -> (i32, i32) {
    %c0_i32 = arith.constant 0 : i32
    %c0_i32_0 = arith.constant 0 : i32
    return %arg0, %c0_i32 : i32, i32
  }
}

</mosaic_0001>

<llo_original>
// kernel: deepcownet_forward.1
$region0: #{deepcownet_forward.1}
  #allocation0 [shape = 'u32[]', space=smem, size = 0x4, offset = 0x4, fixed_abs, tag = 'smem constant byte address 0x4 - core index']
  #allocation1 [shape = 'u32[144,128]{1,0:T(1,128)}', space=vmem, size = 0x12000, scoped, tag = 'internal scratch']
  %s0 = inlined_call_operand.hbm [shape: f32[8,16], index: 0, kind: input, shape index: {}]
  %s1 = inlined_call_operand.hbm [shape: bf16[16,256], index: 1, kind: input, shape index: {}]
  %s2 = inlined_call_operand.vmem [shape: bf16[256,128], index: 2, kind: input, shape index: {}]
  %s3 = inlined_call_operand.vmem [shape: bf16[128,64], index: 3, kind: input, shape index: {}]
  %s4 = inlined_call_operand.vmem [shape: bf16[64,32], index: 4, kind: input, shape index: {}]
  %s5 = inlined_call_operand.vmem [shape: bf16[32,4], index: 5, kind: input, shape index: {}]
  %s6 = inlined_call_operand.hbm [shape: f32[8,256], index: 6, kind: input, shape index: {}]
  %s7 = inlined_call_operand.vmem [shape: f32[1,4], index: 7, kind: input, shape index: {}]
  %s8 = inlined_call_operand.vmem [shape: f32[8,4], index: 8, kind: output, shape index: {}]
  %s9 = sld [smem:[#allocation0]]
  $region54: #{deepcownet_forward.1} parent=0
    _
  %s11 = ssub.s32 1, %s9
  %s12 = scalar_select 0, %s11, %s9
  $region1: #{deepcownet_forward.1} parent=0
    #allocation2 [shape = 'u8[4096]{0}', space=vmem, size = 0x1000, scoped, tag = 'input window, operand 0, single buffered']
    #allocation3 [shape = 's32[1]{0}', space=sflag, size = 0x4, scoped, tag = 'scoped memory for deepcownet_forward.1']
    #allocation4 [shape = 'u8[8192]{0}', space=vmem, size = 0x2000, scoped, tag = 'input window, operand 1, single buffered']
    #allocation5 [shape = 's32[1]{0}', space=sflag, size = 0x4, scoped, tag = 'scoped memory for deepcownet_forward.1']
    #allocation6 [shape = 'u8[8192]{0}', space=vmem, size = 0x2000, scoped, tag = 'input window, operand 6, single buffered']
    %13 = vsyncpa [#allocation3], 0
    %14 = vsyncpa [#allocation5], 0
    // Predicated region
    $region2: #{deepcownet_forward.1} parent=1 // pred_check
      _
    $region3: #{deepcownet_forward.1} parent=1 // pred_check_branch
      %16 = sbr.rel (0) target = $region5
    $region4: #{deepcownet_forward.1} parent=1 // pred_region
      %s18 = ssub.s32 128, 128
      %19 = vsyncadd [#allocation3], %s18
      %s21 = sshll.u32 [#allocation2], 4
      %s22 = int_to_ptr.vmem [resolvable:$true] %s21
      %24 = dma.hbm_to_vmem [thread:$0]  %s0, 128, %s22, [#allocation3]
    $region5: #{deepcownet_forward.1} parent=1 // pred_fallthru
      _
    // Predicated region
    $region6: #{deepcownet_forward.1} parent=1 // pred_check
      _
    $region7: #{deepcownet_forward.1} parent=1 // pred_check_branch
      %26 = sbr.rel (0) target = $region9
    $region8: #{deepcownet_forward.1} parent=1 // pred_region
      %s28 = ssub.s32 256, 256
      %29 = vsyncadd [#allocation5], %s28
      %s30 = sshll.u32 [#allocation4], 4
      %s31 = int_to_ptr.vmem [resolvable:$true] %s30
      %36 = dma.hbm_to_vmem [thread:$0]  %s1, 256, %s31, [#allocation5], 128, 128, 8
    $region9: #{deepcownet_forward.1} parent=1 // pred_fallthru
      _
    // Predicated region
    $region10: #{deepcownet_forward.1} parent=1 // pred_check
      _
    $region11: #{deepcownet_forward.1} parent=1 // pred_check_branch
      %38 = sbr.rel (0) target = $region13
    $region12: #{deepcownet_forward.1} parent=1 // pred_region
      _
    $region13: #{deepcownet_forward.1} parent=1 // pred_fallthru
      _
    // Predicated region
    $region14: #{deepcownet_forward.1} parent=1 // pred_check
      _
    $region15: #{deepcownet_forward.1} parent=1 // pred_check_branch
      %40 = sbr.rel (0) target = $region17
    $region16: #{deepcownet_forward.1} parent=1 // pred_region
      _
    $region17: #{deepcownet_forward.1} parent=1 // pred_fallthru
      _
    // Predicated region
    $region18: #{deepcownet_forward.1} parent=1 // pred_check
      _
    $region19: #{deepcownet_forward.1} parent=1 // pred_check_branch
      %42 = sbr.rel (0) target = $region21
    $region20: #{deepcownet_forward.1} parent=1 // pred_region
      _
    $region21: #{deepcownet_forward.1} parent=1 // pred_fallthru
      _
    // Predicated region
    $region22: #{deepcownet_forward.1} parent=1 // pred_check
      _
    $region23: #{deepcownet_forward.1} parent=1 // pred_check_branch
      %44 = sbr.rel (0) target = $region25
    $region24: #{deepcownet_forward.1} parent=1 // pred_region
      _
    $region25: #{deepcownet_forward.1} parent=1 // pred_fallthru
      _
    // Predicated region
    $region26: #{deepcownet_forward.1} parent=1 // pred_check
      _
    $region27: #{deepcownet_forward.1} parent=1 // pred_check_branch
      %46 = sbr.rel (0) target = $region29
    $region28: #{deepcownet_forward.1} parent=1 // pred_region
      %s48 = ssub.s32 256, 256
      %49 = vsyncadd [#allocation5], %s48
      %s51 = sshll.u32 [#allocation6], 4
      %s52 = int_to_ptr.vmem [resolvable:$true] %s51
      %54 = dma.hbm_to_vmem [thread:$0]  %s6, 256, %s52, [#allocation5]
    $region29: #{deepcownet_forward.1} parent=1 // pred_fallthru
      _
    // Predicated region
    $region30: #{deepcownet_forward.1} parent=1 // pred_check
      _
    $region31: #{deepcownet_forward.1} parent=1 // pred_check_branch
      %56 = sbr.rel (0) target = $region33
    $region32: #{deepcownet_forward.1} parent=1 // pred_region
      _
    $region33: #{deepcownet_forward.1} parent=1 // pred_fallthru
      _
    // Predicated region
    $region34: #{deepcownet_forward.1} parent=1 // pred_check
      _
    $region35: #{deepcownet_forward.1} parent=1 // pred_check_branch
      %58 = sbr.rel (0) target = $region37
    $region36: #{deepcownet_forward.1} parent=1 // pred_region
      %59 = dma.done [#allocation3], 128
    $region37: #{deepcownet_forward.1} parent=1 // pred_fallthru
      _
    // Predicated region
    $region38: #{deepcownet_forward.1} parent=1 // pred_check
      _
    $region39: #{deepcownet_forward.1} parent=1 // pred_check_branch
      %61 = sbr.rel (0) target = $region41
    $region40: #{deepcownet_forward.1} parent=1 // pred_region
      %62 = dma.done [#allocation5], 256
    $region41: #{deepcownet_forward.1} parent=1 // pred_fallthru
      _
    // Predicated region
    $region42: #{deepcownet_forward.1} parent=1 // pred_check
      _
    $region43: #{deepcownet_forward.1} parent=1 // pred_check_branch
      %64 = sbr.rel (0) target = $region45
    $region44: #{deepcownet_forward.1} parent=1 // pred_region
      %65 = dma.done [#allocation5], 256
    $region45: #{deepcownet_forward.1} parent=1 // pred_fallthru
      _
    %v67 = vld [vmem:[#allocation2] sm:$0xff]
    %v68 = vpack.c.bf16 %v67, %v67
    %v69 = vld [vmem:[#allocation4] sm:$0xff]
    %v70 = vld [vmem:[#allocation4 + $0x8] sm:$0xff]
    %v71 = vld [vmem:[#allocation6] ss:$8 sm:$0x3]
    %v73 = vlaneseq
    %v74 = vshrl.u32 %v73, 7
    %v75 = vsub.s32 0, %v74
    %v76 = vrot.slane %v71, %v75
    %v77 = vlaneseq
    %v78 = vshrl.u32 %v77, 7
    %v79 = vsub.s32 1, %v78
    %v80 = vrot.slane %v71, %v79
    %v85 = vunpack.c.l.b16 %v69
    %v86 = vunpack.c.h.b16 %v69
    %v87 = vunpack.c.l.b16 %v70
    %v88 = vunpack.c.h.b16 %v70
    %v89 = vpack.c.b16 %v87, %v85
    %v90 = vpack.c.b16 %v88, %v86
    %vm93 = vcmask 130048
    %v95 = vsel %vm93, %v68, 0
    %97 = vmatprep.subr.bf16.mxu0 0
    %98 = vmatpush1.bf16.msra.mxu0 0
    %99 = vmatprep.subr.bf16.mxu0 0
    %100 = vmatpush1.bf16.msra.mxu0 0
    %101 = vmatprep.subr.bf16.mxu0 0
    %102 = vmatpush1.bf16.msra.mxu0 0
    %103 = vmatprep.subr.bf16.mxu0 0
    %104 = vmatpush1.bf16.msra.mxu0 0
    %105 = vmatprep.subr.bf16.mxu0 0
    %106 = vmatpush1.bf16.msra.mxu0 0
    %107 = vmatprep.subr.bf16.mxu0 0
    %108 = vmatpush1.bf16.msra.mxu0 0
    %109 = vmatprep.subr.bf16.mxu0 0
    %110 = vmatpush1.bf16.msra.mxu0 0
    %111 = vmatprep.subr.bf16.mxu0 %v90
    %112 = vmatpush1.bf16.msra.mxu0 %v89
    %113 = vmatprep.subr.bf16.mxu0 0
    %114 = vmatpush2.bf16.msra.mxu0 0
    %115 = vmatprep.subr.bf16.mxu0 0
    %116 = vmatpush2.bf16.msra.mxu0 0
    %117 = vmatprep.subr.bf16.mxu0 0
    %118 = vmatpush2.bf16.msra.mxu0 0
    %119 = vmatprep.subr.bf16.mxu0 0
    %120 = vmatpush2.bf16.msra.mxu0 0
    %121 = vmatprep.subr.bf16.mxu0 0
    %122 = vmatpush2.bf16.msra.mxu0 0
    %123 = vmatprep.subr.bf16.mxu0 0
    %124 = vmatpush2.bf16.msra.mxu0 0
    %125 = vmatprep.subr.bf16.mxu0 0
    %126 = vmatpush2.bf16.msra.mxu0 0
    %127 = vmatprep.subr.bf16.mxu0 0
    %128 = vmatpush2.bf16.msra.mxu0 0
    %129 = vmatprep.mubr.bf16.mxu0 0
    %130 = vmatmul.mubr.bf16.gmra.mxu0 %v95
    %v131 = vpop.f32.mrf.mxu0
    %v132 = vadd.f32 %v76, %v131
    %v133 = vpop.f32.mrf.mxu0
    %v134 = vadd.f32 %v80, %v133
    %v135 = vpop.f32.mrf.mxu0
    %v136 = vpop.f32.mrf.mxu0
    %137 = vdwg.mxu0
    %vm138 = vcmp.ge.f32.partialorder %v132, 0.0
    %vm139 = vcmp.ge.f32.partialorder %v134, 0.0
    %v140 = vmul.f32 %v132, 0.1
    %v141 = vmul.f32 %v134, 0.1
    %v142 = vsel %vm138, %v132, %v140
    %v143 = vsel %vm139, %v134, %v141
    %v144 = vpack.c.bf16 %v142, %v142
    %v145 = vpack.c.bf16 %v143, %v143
    %v146 = vld [vmem:[%s2] sm:$0xf]
    %v147 = vld [vmem:[%s2 + $0x4] sm:$0xf]
    %v148 = vld [vmem:[%s2 + $0x8] sm:$0xf]
    %v149 = vld [vmem:[%s2 + $0xc] sm:$0xf]
    %v150 = vld [vmem:[%s2 + $0x10] sm:$0xf]
    %v151 = vld [vmem:[%s2 + $0x14] sm:$0xf]
    %v152 = vld [vmem:[%s2 + $0x18] sm:$0xf]
    %v153 = vld [vmem:[%s2 + $0x1c] sm:$0xf]
    %v154 = vld [vmem:[%s2 + $0x20] sm:$0xf]
    %v155 = vld [vmem:[%s2 + $0x24] sm:$0xf]
    %v156 = vld [vmem:[%s2 + $0x28] sm:$0xf]
    %v157 = vld [vmem:[%s2 + $0x2c] sm:$0xf]
    %v158 = vld [vmem:[%s2 + $0x30] sm:$0xf]
    %v159 = vld [vmem:[%s2 + $0x34] sm:$0xf]
    %v160 = vld [vmem:[%s2 + $0x38] sm:$0xf]
    %v161 = vld [vmem:[%s2 + $0x3c] sm:$0xf]
    %v162 = vld [vmem:[%s2 + $0x40] sm:$0xf]
    %v163 = vld [vmem:[%s2 + $0x44] sm:$0xf]
    %v164 = vld [vmem:[%s2 + $0x48] sm:$0xf]
    %v165 = vld [vmem:[%s2 + $0x4c] sm:$0xf]
    %v166 = vld [vmem:[%s2 + $0x50] sm:$0xf]
    %v167 = vld [vmem:[%s2 + $0x54] sm:$0xf]
    %v168 = vld [vmem:[%s2 + $0x58] sm:$0xf]
    %v169 = vld [vmem:[%s2 + $0x5c] sm:$0xf]
    %v170 = vld [vmem:[%s2 + $0x60] sm:$0xf]
    %v171 = vld [vmem:[%s2 + $0x64] sm:$0xf]
    %v172 = vld [vmem:[%s2 + $0x68] sm:$0xf]
    %v173 = vld [vmem:[%s2 + $0x6c] sm:$0xf]
    %v174 = vld [vmem:[%s2 + $0x70] sm:$0xf]
    %v175 = vld [vmem:[%s2 + $0x74] sm:$0xf]
    %v176 = vld [vmem:[%s2 + $0x78] sm:$0xf]
    %v177 = vld [vmem:[%s2 + $0x7c] sm:$0xf]
    %v178 = vld [vmem:[#allocation6 + $0x1] ss:$0 sm:$0xff]
    %v211 = vunpack.c.l.b16 %v146
    %v212 = vunpack.c.l.b16 %v147
    %v213 = vunpack.c.l.b16 %v148
    %v214 = vunpack.c.l.b16 %v149
    %v215 = vunpack.c.l.b16 %v150
    %v216 = vunpack.c.l.b16 %v151
    %v217 = vunpack.c.l.b16 %v152
    %v218 = vunpack.c.l.b16 %v153
    %v219 = vunpack.c.l.b16 %v154
    %v220 = vunpack.c.l.b16 %v155
    %v221 = vunpack.c.l.b16 %v156
    %v222 = vunpack.c.l.b16 %v157
    %v223 = vunpack.c.l.b16 %v158
    %v224 = vunpack.c.l.b16 %v159
    %v225 = vunpack.c.l.b16 %v160
    %v226 = vunpack.c.l.b16 %v161
    %v227 = vunpack.c.l.b16 %v162
    %v228 = vunpack.c.l.b16 %v163
    %v229 = vunpack.c.l.b16 %v164
    %v230 = vunpack.c.l.b16 %v165
    %v231 = vunpack.c.l.b16 %v166
    %v232 = vunpack.c.l.b16 %v167
    %v233 = vunpack.c.l.b16 %v168
    %v234 = vunpack.c.l.b16 %v169
    %v235 = vunpack.c.l.b16 %v170
    %v236 = vunpack.c.l.b16 %v171
    %v237 = vunpack.c.l.b16 %v172
    %v238 = vunpack.c.l.b16 %v173
    %v239 = vunpack.c.l.b16 %v174
    %v240 = vunpack.c.l.b16 %v175
    %v241 = vunpack.c.l.b16 %v176
    %v242 = vunpack.c.l.b16 %v177
    %v243 = vpack.c.b16 %v212, %v211
    %v244 = vpack.c.b16 %v214, %v213
    %v245 = vpack.c.b16 %v216, %v215
    %v246 = vpack.c.b16 %v218, %v217
    %v247 = vpack.c.b16 %v220, %v219
    %v248 = vpack.c.b16 %v222, %v221
    %v249 = vpack.c.b16 %v224, %v223
    %v250 = vpack.c.b16 %v226, %v225
    %v251 = vpack.c.b16 %v228, %v227
    %v252 = vpack.c.b16 %v230, %v229
    %v253 = vpack.c.b16 %v232, %v231
    %v254 = vpack.c.b16 %v234, %v233
    %v255 = vpack.c.b16 %v236, %v235
    %v256 = vpack.c.b16 %v238, %v237
    %v257 = vpack.c.b16 %v240, %v239
    %v258 = vpack.c.b16 %v242, %v241
    %275 = vmatprep.subr.bf16.mxu0 0
    %276 = vmatpush1.bf16.msra.mxu0 %v250
    %277 = vmatprep.subr.bf16.mxu0 0
    %278 = vmatpush1.bf16.msra.mxu0 %v249
    %279 = vmatprep.subr.bf16.mxu0 0
    %280 = vmatpush1.bf16.msra.mxu0 %v248
    %281 = vmatprep.subr.bf16.mxu0 0
    %282 = vmatpush1.bf16.msra.mxu0 %v247
    %283 = vmatprep.subr.bf16.mxu0 0
    %284 = vmatpush1.bf16.msra.mxu0 %v246
    %285 = vmatprep.subr.bf16.mxu0 0
    %286 = vmatpush1.bf16.msra.mxu0 %v245
    %287 = vmatprep.subr.bf16.mxu0 0
    %288 = vmatpush1.bf16.msra.mxu0 %v244
    %289 = vmatprep.subr.bf16.mxu0 0
    %290 = vmatpush1.bf16.msra.mxu0 %v243
    %291 = vmatprep.subr.bf16.mxu0 0
    %292 = vmatpush2.bf16.msra.mxu0 %v258
    %293 = vmatprep.subr.bf16.mxu0 0
    %294 = vmatpush2.bf16.msra.mxu0 %v257
    %295 = vmatprep.subr.bf16.mxu0 0
    %296 = vmatpush2.bf16.msra.mxu0 %v256
    %297 = vmatprep.subr.bf16.mxu0 0
    %298 = vmatpush2.bf16.msra.mxu0 %v255
    %299 = vmatprep.subr.bf16.mxu0 0
    %300 = vmatpush2.bf16.msra.mxu0 %v254
    %301 = vmatprep.subr.bf16.mxu0 0
    %302 = vmatpush2.bf16.msra.mxu0 %v253
    %303 = vmatprep.subr.bf16.mxu0 0
    %304 = vmatpush2.bf16.msra.mxu0 %v252
    %305 = vmatprep.subr.bf16.mxu0 0
    %306 = vmatpush2.bf16.msra.mxu0 %v251
    %307 = vmatprep.mubr.bf16.mxu0 %v145
    %308 = vmatmul.mubr.bf16.gmra.mxu0 %v144
    %v309 = vpop.f32.mrf.mxu0
    %v310 = vadd.f32 %v178, %v309
    %v311 = vpop.f32.mrf.mxu0
    %v312 = vpop.f32.mrf.mxu0
    %v313 = vpop.f32.mrf.mxu0
    %314 = vdwg.mxu0
    %vm315 = vcmp.ge.f32.partialorder %v310, 0.0
    %v316 = vmul.f32 %v310, 0.1
    %v317 = vsel %vm315, %v310, %v316
    %v318 = vpack.c.bf16 %v317, %v317
    %v319 = vld [vmem:[%s3] sm:$0xf]
    %v320 = vld [vmem:[%s3 + $0x4] sm:$0xf]
    %v321 = vld [vmem:[%s3 + $0x8] sm:$0xf]
    %v322 = vld [vmem:[%s3 + $0xc] sm:$0xf]
    %v323 = vld [vmem:[%s3 + $0x10] sm:$0xf]
    %v324 = vld [vmem:[%s3 + $0x14] sm:$0xf]
    %v325 = vld [vmem:[%s3 + $0x18] sm:$0xf]
    %v326 = vld [vmem:[%s3 + $0x1c] sm:$0xf]
    %v327 = vld [vmem:[%s3 + $0x20] sm:$0xf]
    %v328 = vld [vmem:[%s3 + $0x24] sm:$0xf]
    %v329 = vld [vmem:[%s3 + $0x28] sm:$0xf]
    %v330 = vld [vmem:[%s3 + $0x2c] sm:$0xf]
    %v331 = vld [vmem:[%s3 + $0x30] sm:$0xf]
    %v332 = vld [vmem:[%s3 + $0x34] sm:$0xf]
    %v333 = vld [vmem:[%s3 + $0x38] sm:$0xf]
    %v334 = vld [vmem:[%s3 + $0x3c] sm:$0xf]
    %v335 = vld [vmem:[#allocation6 + $0x2] ss:$0 sm:$0xff]
    %v352 = vunpack.c.l.b16 %v319
    %v353 = vunpack.c.l.b16 %v320
    %v354 = vunpack.c.l.b16 %v321
    %v355 = vunpack.c.l.b16 %v322
    %v356 = vunpack.c.l.b16 %v323
    %v357 = vunpack.c.l.b16 %v324
    %v358 = vunpack.c.l.b16 %v325
    %v359 = vunpack.c.l.b16 %v326
    %v360 = vunpack.c.l.b16 %v327
    %v361 = vunpack.c.l.b16 %v328
    %v362 = vunpack.c.l.b16 %v329
    %v363 = vunpack.c.l.b16 %v330
    %v364 = vunpack.c.l.b16 %v331
    %v365 = vunpack.c.l.b16 %v332
    %v366 = vunpack.c.l.b16 %v333
    %v367 = vunpack.c.l.b16 %v334
    %v368 = vpack.c.b16 %v353, %v352
    %v369 = vpack.c.b16 %v355, %v354
    %v370 = vpack.c.b16 %v357, %v356
    %v371 = vpack.c.b16 %v359, %v358
    %v372 = vpack.c.b16 %v361, %v360
    %v373 = vpack.c.b16 %v363, %v362
    %v374 = vpack.c.b16 %v365, %v364
    %v375 = vpack.c.b16 %v367, %v366
    %384 = vmatprep.subr.bf16.mxu0 0
    %385 = vmatpush1.bf16.msra.mxu0 %v375
    %386 = vmatprep.subr.bf16.mxu0 0
    %387 = vmatpush1.bf16.msra.mxu0 %v374
    %388 = vmatprep.subr.bf16.mxu0 0
    %389 = vmatpush1.bf16.msra.mxu0 %v373
    %390 = vmatprep.subr.bf16.mxu0 0
    %391 = vmatpush1.bf16.msra.mxu0 %v372
    %392 = vmatprep.subr.bf16.mxu0 0
    %393 = vmatpush1.bf16.msra.mxu0 %v371
    %394 = vmatprep.subr.bf16.mxu0 0
    %395 = vmatpush1.bf16.msra.mxu0 %v370
    %396 = vmatprep.subr.bf16.mxu0 0
    %397 = vmatpush1.bf16.msra.mxu0 %v369
    %398 = vmatprep.subr.bf16.mxu0 0
    %399 = vmatpush1.bf16.msra.mxu0 %v368
    %400 = vmatprep.subr.bf16.mxu0 0
    %401 = vmatpush2.bf16.msra.mxu0 0
    %402 = vmatprep.subr.bf16.mxu0 0
    %403 = vmatpush2.bf16.msra.mxu0 0
    %404 = vmatprep.subr.bf16.mxu0 0
    %405 = vmatpush2.bf16.msra.mxu0 0
    %406 = vmatprep.subr.bf16.mxu0 0
    %407 = vmatpush2.bf16.msra.mxu0 0
    %408 = vmatprep.subr.bf16.mxu0 0
    %409 = vmatpush2.bf16.msra.mxu0 0
    %410 = vmatprep.subr.bf16.mxu0 0
    %411 = vmatpush2.bf16.msra.mxu0 0
    %412 = vmatprep.subr.bf16.mxu0 0
    %413 = vmatpush2.bf16.msra.mxu0 0
    %414 = vmatprep.subr.bf16.mxu0 0
    %415 = vmatpush2.bf16.msra.mxu0 0
    %416 = vmatprep.mubr.bf16.mxu0 0
    %417 = vmatmul.mubr.bf16.gmra.mxu0 %v318
    %v418 = vpop.f32.mrf.mxu0
    %v419 = vadd.f32 %v335, %v418
    %v420 = vpop.f32.mrf.mxu0
    %v421 = vpop.f32.mrf.mxu0
    %v422 = vpop.f32.mrf.mxu0
    %423 = vdwg.mxu0
    %vm424 = vcmp.ge.f32.partialorder %v419, 0.0
    %v425 = vmul.f32 %v419, 0.1
    %v426 = vsel %vm424, %v419, %v425
    %v427 = vpack.c.bf16 %v426, %v426
    %v428 = vld [vmem:[%s4] sm:$0xf]
    %v429 = vld [vmem:[%s4 + $0x4] sm:$0xf]
    %v430 = vld [vmem:[%s4 + $0x8] sm:$0xf]
    %v431 = vld [vmem:[%s4 + $0xc] sm:$0xf]
    %v432 = vld [vmem:[%s4 + $0x10] sm:$0xf]
    %v433 = vld [vmem:[%s4 + $0x14] sm:$0xf]
    %v434 = vld [vmem:[%s4 + $0x18] sm:$0xf]
    %v435 = vld [vmem:[%s4 + $0x1c] sm:$0xf]
    %v436 = vld [vmem:[#allocation6 + $0x3] ss:$0 sm:$0xff]
    %v445 = vunpack.c.l.b16 %v428
    %v446 = vunpack.c.l.b16 %v429
    %v447 = vunpack.c.l.b16 %v430
    %v448 = vunpack.c.l.b16 %v431
    %v449 = vunpack.c.l.b16 %v432
    %v450 = vunpack.c.l.b16 %v433
    %v451 = vunpack.c.l.b16 %v434
    %v452 = vunpack.c.l.b16 %v435
    %v453 = vpack.c.b16 %v446, %v445
    %v454 = vpack.c.b16 %v448, %v447
    %v455 = vpack.c.b16 %v450, %v449
    %v456 = vpack.c.b16 %v452, %v451
    %vm461 = vcmask 523264
    %v463 = vsel %vm461, %v427, 0
    %465 = vmatprep.subr.bf16.mxu0 0
    %466 = vmatpush1.bf16.msra.mxu0 0
    %467 = vmatprep.subr.bf16.mxu0 0
    %468 = vmatpush1.bf16.msra.mxu0 0
    %469 = vmatprep.subr.bf16.mxu0 0
    %470 = vmatpush1.bf16.msra.mxu0 0
    %471 = vmatprep.subr.bf16.mxu0 0
    %472 = vmatpush1.bf16.msra.mxu0 0
    %473 = vmatprep.subr.bf16.mxu0 0
    %474 = vmatpush1.bf16.msra.mxu0 %v456
    %475 = vmatprep.subr.bf16.mxu0 0
    %476 = vmatpush1.bf16.msra.mxu0 %v455
    %477 = vmatprep.subr.bf16.mxu0 0
    %478 = vmatpush1.bf16.msra.mxu0 %v454
    %479 = vmatprep.subr.bf16.mxu0 0
    %480 = vmatpush1.bf16.msra.mxu0 %v453
    %481 = vmatprep.subr.bf16.mxu0 0
    %482 = vmatpush2.bf16.msra.mxu0 0
    %483 = vmatprep.subr.bf16.mxu0 0
    %484 = vmatpush2.bf16.msra.mxu0 0
    %485 = vmatprep.subr.bf16.mxu0 0
    %486 = vmatpush2.bf16.msra.mxu0 0
    %487 = vmatprep.subr.bf16.mxu0 0
    %488 = vmatpush2.bf16.msra.mxu0 0
    %489 = vmatprep.subr.bf16.mxu0 0
    %490 = vmatpush2.bf16.msra.mxu0 0
    %491 = vmatprep.subr.bf16.mxu0 0
    %492 = vmatpush2.bf16.msra.mxu0 0
    %493 = vmatprep.subr.bf16.mxu0 0
    %494 = vmatpush2.bf16.msra.mxu0 0
    %495 = vmatprep.subr.bf16.mxu0 0
    %496 = vmatpush2.bf16.msra.mxu0 0
    %497 = vmatprep.mubr.bf16.mxu0 0
    %498 = vmatmul.mubr.bf16.gmra.mxu0 %v463
    %v499 = vpop.f32.mrf.mxu0
    %v500 = vadd.f32 %v436, %v499
    %v501 = vpop.f32.mrf.mxu0
    %v502 = vpop.f32.mrf.mxu0
    %v503 = vpop.f32.mrf.mxu0
    %504 = vdwg.mxu0
    %vm505 = vcmp.ge.f32.partialorder %v500, 0.0
    %v506 = vmul.f32 %v500, 0.1
    %v507 = vsel %vm505, %v500, %v506
    %v508 = vpack.c.bf16 %v507, %v507
    %v509 = vld [vmem:[%s5] sm:$0xf]
    %v510 = vld [vmem:[%s5 + $0x4] sm:$0xf]
    %v511 = vld [vmem:[%s5 + $0x8] sm:$0xf]
    %v512 = vld [vmem:[%s5 + $0xc] sm:$0xf]
    %v513 = vld [vmem:[%s7] sm:$0x1]
    %v515 = vlaneseq
    %v516 = vshrl.u32 %v515, 7
    %v517 = vsub.s32 0, %v516
    %v518 = vrot.slane %v513, %v517
    %v524 = vunpack.c.l.b16 %v509
    %v525 = vunpack.c.l.b16 %v510
    %v526 = vunpack.c.l.b16 %v511
    %v527 = vunpack.c.l.b16 %v512
    %v528 = vpack.c.b16 %v525, %v524
    %v529 = vpack.c.b16 %v527, %v526
    %vm532 = vcmask 261120
    %v534 = vsel %vm532, %v508, 0
    %536 = vmatprep.subr.bf16.mxu0 0
    %537 = vmatpush1.bf16.msra.mxu0 0
    %538 = vmatprep.subr.bf16.mxu0 0
    %539 = vmatpush1.bf16.msra.mxu0 0
    %540 = vmatprep.subr.bf16.mxu0 0
    %541 = vmatpush1.bf16.msra.mxu0 0
    %542 = vmatprep.subr.bf16.mxu0 0
    %543 = vmatpush1.bf16.msra.mxu0 0
    %544 = vmatprep.subr.bf16.mxu0 0
    %545 = vmatpush1.bf16.msra.mxu0 0
    %546 = vmatprep.subr.bf16.mxu0 0
    %547 = vmatpush1.bf16.msra.mxu0 0
    %548 = vmatprep.subr.bf16.mxu0 0
    %549 = vmatpush1.bf16.msra.mxu0 %v529
    %550 = vmatprep.subr.bf16.mxu0 0
    %551 = vmatpush1.bf16.msra.mxu0 %v528
    %552 = vmatprep.subr.bf16.mxu0 0
    %553 = vmatpush2.bf16.msra.mxu0 0
    %554 = vmatprep.subr.bf16.mxu0 0
    %555 = vmatpush2.bf16.msra.mxu0 0
    %556 = vmatprep.subr.bf16.mxu0 0
    %557 = vmatpush2.bf16.msra.mxu0 0
    %558 = vmatprep.subr.bf16.mxu0 0
    %559 = vmatpush2.bf16.msra.mxu0 0
    %560 = vmatprep.subr.bf16.mxu0 0
    %561 = vmatpush2.bf16.msra.mxu0 0
    %562 = vmatprep.subr.bf16.mxu0 0
    %563 = vmatpush2.bf16.msra.mxu0 0
    %564 = vmatprep.subr.bf16.mxu0 0
    %565 = vmatpush2.bf16.msra.mxu0 0
    %566 = vmatprep.subr.bf16.mxu0 0
    %567 = vmatpush2.bf16.msra.mxu0 0
    %568 = vmatprep.mubr.bf16.mxu0 0
    %569 = vmatmul.mubr.bf16.gmra.mxu0 %v534
    %v570 = vpop.f32.mrf.mxu0
    %v571 = vadd.f32 %v518, %v570
    %v572 = vpop.f32.mrf.mxu0
    %v573 = vpop.f32.mrf.mxu0
    %v574 = vpop.f32.mrf.mxu0
    %575 = vdwg.mxu0
    %vm576 = vcmask 31744
    %577 = vst.msk [vmem:[%s8] sm:$0xff] %vm576, %v571
    // Predicated region
    $region46: #{deepcownet_forward.1} parent=1 // pred_check
      _
    $region47: #{deepcownet_forward.1} parent=1 // pred_check_branch
      %579 = sbr.rel (0) target = $region49
    $region48: #{deepcownet_forward.1} parent=1 // pred_region
      _
    $region49: #{deepcownet_forward.1} parent=1 // pred_fallthru
      _
    // Predicated region
    $region50: #{deepcownet_forward.1} parent=1 // pred_check
      _
    $region51: #{deepcownet_forward.1} parent=1 // pred_check_branch
      %581 = sbr.rel (0) target = $region53
    $region52: #{deepcownet_forward.1} parent=1 // pred_region
      _
    $region53: #{deepcownet_forward.1} parent=1 // pred_fallthru
      _
    %582 = vsyncpa [#allocation3], 1
    %583 = vsyncpa [#allocation5], 1

</llo_original>
